<compile_context>
chip_gen: v5e
topology: v5e:2x2
jax: 0.10.0
libtpu: 0.0.40
codegen_flags: <defaults>
</compile_context>

<pallas_src>
import jax
import jax.numpy as jnp
from jax.experimental import pallas as pl
from jax.experimental.pallas import tpu as pltpu


def decoder_slot_kernel(hidden_ref, slot_d_ref, intent_ref,
                        wv_ref, bv_ref, ww_ref, bw_ref, wfn_ref, bfn_ref,
                        out_ref):
    BB, T, H = slot_d_ref.shape
    cdt = wv_ref.dtype                               # MXU input dtype (f32/bf16)

    slot_d = slot_d_ref[...].astype(jnp.float32)     # (BB, T, H)

    # W(intent_d): one (BB, H) @ (H, H) matmul per batch block (hoisted out of
    # the per-example loop).
    w_int = jnp.dot(intent_ref[...].astype(cdt), ww_ref[...],
                    preferred_element_type=jnp.float32) + bw_ref[...]   # (BB, H)

    # tanh(slot_d + W(intent_d)), broadcasting (BB, 1, H) over T.
    t = jnp.tanh(slot_d + w_int[:, None, :])          # (BB, T, H) f32

    # V(.) on the flattened (BB*T, H) row block -> one large MXU matmul.
    gate = jnp.dot(t.reshape(BB * T, H).astype(cdt), wv_ref[...],
                   preferred_element_type=jnp.float32) + bv_ref[...]
    gate = gate.reshape(BB, T, H)

    # hidden is only needed here; keep its load late so its DMA overlaps the
    # two preceding matmuls.
    output = hidden_ref[...].astype(jnp.float32) + slot_d * gate        # (BB,T,H)

    # fn(.) projection to the lane-dense padded slot dim.
    slots = jnp.dot(output.reshape(BB * T, H).astype(cdt), wfn_ref[...],
                    preferred_element_type=jnp.float32) + bfn_ref[...]  # (BB*T,S_pad)
    out_ref[...] = slots.reshape(out_ref.shape).astype(out_ref.dtype)


def prepare_weights(params, *, mxu_dtype=None, lane=128):
    """One-time weight prep: transpose to (in, out), pad fn to a lane-dense
    slot dim, optionally cast weights to bf16 for the MXU.  Call once, reuse —
    do NOT re-materialize transposes on every forward call."""
    H = params["V_w"].shape[0]
    S = params["fn_w"].shape[0]
    S_pad = ((S + lane - 1) // lane) * lane
    wdt = params["V_w"].dtype if mxu_dtype is None else mxu_dtype

    fn_w_t = jnp.zeros((H, S_pad), wdt).at[:, :S].set(params["fn_w"].T.astype(wdt))
    fn_b = jnp.zeros((1, S_pad), jnp.float32).at[:, :S].set(
        params["fn_b"].astype(jnp.float32))
    return {
        "V_w_t": params["V_w"].T.astype(wdt),                    # (H, H)
        "V_b": params["V_b"].reshape(1, H).astype(jnp.float32),  # (1, H)
        "W_w_t": params["W_w"].T.astype(wdt),                    # (H, H)
        "W_b": params["W_b"].reshape(1, H).astype(jnp.float32),  # (1, H)
        "fn_w_t": fn_w_t,                                        # (H, S_pad)
        "fn_b": fn_b,                                            # (1, S_pad)
        "slot_size": S,
    }


def decoder_slot(hidden, slot_d, intent_d, prep, *, block_b=None,
                 target_rows=256):
    """hidden/slot_d: (B, T, H), intent_d: (B, H) -> slots: (B, T, S)."""
    B, T, H = hidden.shape
    S = prep["slot_size"]
    S_pad = prep["fn_w_t"].shape[1]

    # Pick a batch block so each grid step feeds the MXU ~target_rows rows.
    bb = block_b if block_b is not None else max(1, target_rows // T)
    if bb >= B:
        bb = B                        # full batch dim -> always layout-legal
    else:
        bb = max(8, (bb // 8) * 8)    # sublane-aligned partial batch block
        bb = min(bb, B)

    grid = (pl.cdiv(B, bb),)

    out_padded = pl.pallas_call(
        decoder_slot_kernel,
        out_shape=jax.ShapeDtypeStruct((B, T, S_pad), hidden.dtype),
        grid_spec=pltpu.PrefetchScalarGridSpec(
            num_scalar_prefetch=0,
            grid=grid,
            in_specs=[
                pl.BlockSpec((bb, T, H), lambda b: (b, 0, 0)),     # hidden
                pl.BlockSpec((bb, T, H), lambda b: (b, 0, 0)),     # slot_d
                pl.BlockSpec((bb, H), lambda b: (b, 0)),           # intent_d
                # Weights / biases: constant index_map -> fetched once, resident.
                pl.BlockSpec((H, H), lambda b: (0, 0)),            # V weight^T
                pl.BlockSpec((1, H), lambda b: (0, 0)),            # V bias
                pl.BlockSpec((H, H), lambda b: (0, 0)),            # W weight^T
                pl.BlockSpec((1, H), lambda b: (0, 0)),            # W bias
                pl.BlockSpec((H, S_pad), lambda b: (0, 0)),        # fn weight^T (padded)
                pl.BlockSpec((1, S_pad), lambda b: (0, 0)),        # fn bias (padded)
            ],
            out_specs=pl.BlockSpec((bb, T, S_pad), lambda b: (b, 0, 0)),
        ),
        compiler_params=pltpu.CompilerParams(
            dimension_semantics=("parallel",),
            vmem_limit_bytes=32 * 1024 * 1024,
        ),
    )(hidden, slot_d, intent_d,
      prep["V_w_t"], prep["V_b"], prep["W_w_t"], prep["W_b"],
      prep["fn_w_t"], prep["fn_b"])

    return out_padded[..., :S]


def init_params(key, hidden_size, slot_size):
    """Deterministic init mimicking nn.Linear default (uniform +/- 1/sqrt(fan_in))."""
    ks = jax.random.split(key, 6)
    bnd_h = 1.0 / jnp.sqrt(hidden_size)
    return {
        "V_w": jax.random.uniform(ks[0], (hidden_size, hidden_size),
                                  jnp.float32, -bnd_h, bnd_h),
        "V_b": jax.random.uniform(ks[1], (hidden_size,),
                                  jnp.float32, -bnd_h, bnd_h),
        "W_w": jax.random.uniform(ks[2], (hidden_size, hidden_size),
                                  jnp.float32, -bnd_h, bnd_h),
        "W_b": jax.random.uniform(ks[3], (hidden_size,),
                                  jnp.float32, -bnd_h, bnd_h),
        "fn_w": jax.random.uniform(ks[4], (slot_size, hidden_size),
                                   jnp.float32, -bnd_h, bnd_h),
        "fn_b": jax.random.uniform(ks[5], (slot_size,),
                                   jnp.float32, -bnd_h, bnd_h),
    }


def decoder_slot_ref(hidden, slot_d, intent_d, params):
    """Pure-JAX reference (mirrors the PyTorch forward exactly)."""
    intent3 = intent_d[:, None, :]
    w_int = intent3 @ params["W_w"].T + params["W_b"]
    gate = jnp.tanh(slot_d + w_int) @ params["V_w"].T + params["V_b"]
    slot_gate = slot_d * gate
    output = hidden + slot_gate
    return output @ params["fn_w"].T + params["fn_b"]


if __name__ == "__main__":
    key = jax.random.PRNGKey(0)
    k_h, k_s, k_i, k_p = jax.random.split(key, 4)

    # --- small canonical shapes (single batch block) ------------------------
    B, T, H, S = 2, 8, 32, 16
    hidden = jax.random.normal(k_h, (B, T, H), jnp.float32)
    slot_d = jax.random.normal(k_s, (B, T, H), jnp.float32)
    intent_d = jax.random.normal(k_i, (B, H), jnp.float32)
    params = init_params(k_p, H, S)

    prep_f32 = prepare_weights(params)                      # f32 MXU path
    slots = jax.block_until_ready(decoder_slot(hidden, slot_d, intent_d, prep_f32))
    ref = decoder_slot_ref(hidden, slot_d, intent_d, params)
    assert slots.shape == (B, T, S)
    assert jnp.allclose(slots, ref, atol=1e-5, rtol=1e-5)

    # --- bf16 MXU inputs (f32 accumulation), looser tolerance ---------------
    prep_bf16 = prepare_weights(params, mxu_dtype=jnp.bfloat16)
    slots_bf16 = jax.block_until_ready(
        decoder_slot(hidden, slot_d, intent_d, prep_bf16))
    assert slots_bf16.shape == (B, T, S)
    assert float(jnp.max(jnp.abs(slots_bf16 - ref))) < 0.25

    # --- larger batch exercises batch-block tiling (grid > 1) ---------------
    B2 = 64
    hidden2 = jax.random.normal(k_h, (B2, T, H), jnp.float32)
    slot_d2 = jax.random.normal(k_s, (B2, T, H), jnp.float32)
    intent2 = jax.random.normal(k_i, (B2, H), jnp.float32)
    slots2 = jax.block_until_ready(
        decoder_slot(hidden2, slot_d2, intent2, prep_f32))
    ref2 = decoder_slot_ref(hidden2, slot_d2, intent2, params)
    assert slots2.shape == (B2, T, S)
    assert jnp.allclose(slots2, ref2, atol=1e-5, rtol=1e-5)

    print("KERNEL_OK")
</pallas_src>

<mosaic_0001>
module attributes {stable_mosaic.version = 11 : i64} {
  func.func @decoder_slot_kernel(%arg0: i32, %arg1: memref<2x8x32xf32, #tpu.memory_space<vmem>>, %arg2: memref<2x8x32xf32, #tpu.memory_space<vmem>>, %arg3: memref<2x32xf32, #tpu.memory_space<vmem>>, %arg4: memref<32x32xf32, #tpu.memory_space<vmem>>, %arg5: memref<1x32xf32, #tpu.memory_space<vmem>>, %arg6: memref<32x32xf32, #tpu.memory_space<vmem>>, %arg7: memref<1x32xf32, #tpu.memory_space<vmem>>, %arg8: memref<32x128xf32, #tpu.memory_space<vmem>>, %arg9: memref<1x128xf32, #tpu.memory_space<vmem>>, %arg10: memref<2x8x128xf32, #tpu.memory_space<vmem>>) attributes {dimension_semantics = [#tpu.dimension_semantics<parallel>], iteration_bounds = array<i64: 1>, scalar_prefetch = 0 : i64, scratch_operands = 0 : i64, tpu.core_type = #tpu.core_type<tc>, window_params = [{transform_indices = @transform_0, window_bounds = array<i64: 2, 8, 32>}, {transform_indices = @transform_1, window_bounds = array<i64: 2, 8, 32>}, {transform_indices = @transform_2, window_bounds = array<i64: 2, 32>}, {pipeline_mode = #tpu.pipeline_mode<synchronous>, transform_indices = @transform_3, window_bounds = array<i64: 32, 32>}, {pipeline_mode = #tpu.pipeline_mode<synchronous>, transform_indices = @transform_4, window_bounds = array<i64: 1, 32>}, {pipeline_mode = #tpu.pipeline_mode<synchronous>, transform_indices = @transform_5, window_bounds = array<i64: 32, 32>}, {pipeline_mode = #tpu.pipeline_mode<synchronous>, transform_indices = @transform_6, window_bounds = array<i64: 1, 32>}, {pipeline_mode = #tpu.pipeline_mode<synchronous>, transform_indices = @transform_7, window_bounds = array<i64: 32, 128>}, {pipeline_mode = #tpu.pipeline_mode<synchronous>, transform_indices = @transform_8, window_bounds = array<i64: 1, 128>}, {transform_indices = @transform_9, window_bounds = array<i64: 2, 8, 128>}]} {
    %c0 = arith.constant 0 : index
    %c0_0 = arith.constant 0 : index
    %c0_1 = arith.constant 0 : index
    %0 = vector.load %arg2[%c0, %c0_0, %c0_1] : memref<2x8x32xf32, #tpu.memory_space<vmem>>, vector<2x8x32xf32>
    %c0_2 = arith.constant 0 : index
    %c0_3 = arith.constant 0 : index
    %1 = vector.load %arg3[%c0_2, %c0_3] : memref<2x32xf32, #tpu.memory_space<vmem>>, vector<2x32xf32>
    %c0_4 = arith.constant 0 : index
    %c0_5 = arith.constant 0 : index
    %2 = vector.load %arg6[%c0_4, %c0_5] : memref<32x32xf32, #tpu.memory_space<vmem>>, vector<32x32xf32>
    %cst = arith.constant dense<0.000000e+00> : vector<2x32xf32>
    %3 = tpu.matmul %1, %2, %cst {dimension_numbers = #tpu.dot_dimension_numbers<[1], [0], [0], [1], [0, 0, 1, 1], [], []>} : vector<2x32xf32>, vector<32x32xf32>, vector<2x32xf32> -> vector<2x32xf32>
    %c0_6 = arith.constant 0 : index
    %c0_7 = arith.constant 0 : index
    %4 = vector.load %arg7[%c0_6, %c0_7] : memref<1x32xf32, #tpu.memory_space<vmem>>, vector<1x32xf32>
    %5 = vector.broadcast %4 : vector<1x32xf32> to vector<2x32xf32>
    %6 = arith.addf %3, %5 : vector<2x32xf32>
    %7 = vector.shape_cast %6 : vector<2x32xf32> to vector<2x1x32xf32>
    %8 = vector.broadcast %7 : vector<2x1x32xf32> to vector<2x8x32xf32>
    %9 = arith.addf %0, %8 : vector<2x8x32xf32>
    %10 = math.tanh %9 : vector<2x8x32xf32>
    %11 = vector.shape_cast %10 : vector<2x8x32xf32> to vector<16x32xf32>
    %c0_8 = arith.constant 0 : index
    %c0_9 = arith.constant 0 : index
    %12 = vector.load %arg4[%c0_8, %c0_9] : memref<32x32xf32, #tpu.memory_space<vmem>>, vector<32x32xf32>
    %cst_10 = arith.constant dense<0.000000e+00> : vector<16x32xf32>
    %13 = tpu.matmul %11, %12, %cst_10 {dimension_numbers = #tpu.dot_dimension_numbers<[1], [0], [0], [1], [0, 0, 1, 1], [], []>} : vector<16x32xf32>, vector<32x32xf32>, vector<16x32xf32> -> vector<16x32xf32>
    %c0_11 = arith.constant 0 : index
    %c0_12 = arith.constant 0 : index
    %14 = vector.load %arg5[%c0_11, %c0_12] : memref<1x32xf32, #tpu.memory_space<vmem>>, vector<1x32xf32>
    %15 = vector.broadcast %14 : vector<1x32xf32> to vector<16x32xf32>
    %16 = arith.addf %13, %15 : vector<16x32xf32>
    %17 = vector.shape_cast %16 : vector<16x32xf32> to vector<2x8x32xf32>
    %c0_13 = arith.constant 0 : index
    %c0_14 = arith.constant 0 : index
    %c0_15 = arith.constant 0 : index
    %18 = vector.load %arg1[%c0_13, %c0_14, %c0_15] : memref<2x8x32xf32, #tpu.memory_space<vmem>>, vector<2x8x32xf32>
    %19 = arith.mulf %0, %17 : vector<2x8x32xf32>
    %20 = arith.addf %18, %19 : vector<2x8x32xf32>
    %21 = vector.shape_cast %20 : vector<2x8x32xf32> to vector<16x32xf32>
    %c0_16 = arith.constant 0 : index
    %c0_17 = arith.constant 0 : index
    %22 = vector.load %arg8[%c0_16, %c0_17] : memref<32x128xf32, #tpu.memory_space<vmem>>, vector<32x128xf32>
    %cst_18 = arith.constant dense<0.000000e+00> : vector<16x128xf32>
    %23 = tpu.matmul %21, %22, %cst_18 {dimension_numbers = #tpu.dot_dimension_numbers<[1], [0], [0], [1], [0, 0, 1, 1], [], []>} : vector<16x32xf32>, vector<32x128xf32>, vector<16x128xf32> -> vector<16x128xf32>
    %c0_19 = arith.constant 0 : index
    %c0_20 = arith.constant 0 : index
    %24 = vector.load %arg9[%c0_19, %c0_20] : memref<1x128xf32, #tpu.memory_space<vmem>>, vector<1x128xf32>
    %25 = vector.broadcast %24 : vector<1x128xf32> to vector<16x128xf32>
    %26 = arith.addf %23, %25 : vector<16x128xf32>
    %27 = vector.shape_cast %26 : vector<16x128xf32> to vector<2x8x128xf32>
    %c0_21 = arith.constant 0 : index
    %c0_22 = arith.constant 0 : index
    %c0_23 = arith.constant 0 : index
    %28 = vector.load %arg10[%c0_21, %c0_22, %c0_23] : memref<2x8x128xf32, #tpu.memory_space<vmem>>, vector<2x8x128xf32>
    tpu.vector_store %arg10[%c0_21, %c0_22, %c0_23], %27 {strides = array<i32>} : memref<2x8x128xf32, #tpu.memory_space<vmem>>, vector<2x8x128xf32>,
    return
  }
  func.func @transform_0(%arg0: i32) -> (i32, i32, i32) {
    %c0_i32 = arith.constant 0 : i32
    %c0_i32_0 = arith.constant 0 : i32
    %c0_i32_1 = arith.constant 0 : i32
    return %arg0, %c0_i32, %c0_i32_0 : i32, i32, i32
  }
  func.func @transform_1(%arg0: i32) -> (i32, i32, i32) {
    %c0_i32 = arith.constant 0 : i32
    %c0_i32_0 = arith.constant 0 : i32
    %c0_i32_1 = arith.constant 0 : i32
    return %arg0, %c0_i32, %c0_i32_0 : i32, i32, i32
  }
  func.func @transform_2(%arg0: i32) -> (i32, i32) {
    %c0_i32 = arith.constant 0 : i32
    %c0_i32_0 = arith.constant 0 : i32
    return %arg0, %c0_i32 : i32, i32
  }
  func.func @transform_3(%arg0: i32) -> (i32, i32) {
    %c0_i32 = arith.constant 0 : i32
    %c0_i32_0 = arith.constant 0 : i32
    %c0_i32_1 = arith.constant 0 : i32
    return %c0_i32, %c0_i32_0 : i32, i32
  }
  func.func @transform_4(%arg0: i32) -> (i32, i32) {
    %c0_i32 = arith.constant 0 : i32
    %c0_i32_0 = arith.constant 0 : i32
    %c0_i32_1 = arith.constant 0 : i32
    return %c0_i32, %c0_i32_0 : i32, i32
  }
  func.func @transform_5(%arg0: i32) -> (i32, i32) {
    %c0_i32 = arith.constant 0 : i32
    %c0_i32_0 = arith.constant 0 : i32
    %c0_i32_1 = arith.constant 0 : i32
    return %c0_i32, %c0_i32_0 : i32, i32
  }
  func.func @transform_6(%arg0: i32) -> (i32, i32) {
    %c0_i32 = arith.constant 0 : i32
    %c0_i32_0 = arith.constant 0 : i32
    %c0_i32_1 = arith.constant 0 : i32
    return %c0_i32, %c0_i32_0 : i32, i32
  }
  func.func @transform_7(%arg0: i32) -> (i32, i32) {
    %c0_i32 = arith.constant 0 : i32
    %c0_i32_0 = arith.constant 0 : i32
    %c0_i32_1 = arith.constant 0 : i32
    return %c0_i32, %c0_i32_0 : i32, i32
  }
  func.func @transform_8(%arg0: i32) -> (i32, i32) {
    %c0_i32 = arith.constant 0 : i32
    %c0_i32_0 = arith.constant 0 : i32
    %c0_i32_1 = arith.constant 0 : i32
    return %c0_i32, %c0_i32_0 : i32, i32
  }
  func.func @transform_9(%arg0: i32) -> (i32, i32, i32) {
    %c0_i32 = arith.constant 0 : i32
    %c0_i32_0 = arith.constant 0 : i32
    %c0_i32_1 = arith.constant 0 : i32
    return %arg0, %c0_i32, %c0_i32_0 : i32, i32, i32
  }
}

</mosaic_0001>

<llo_original>
// kernel: tpu_custom_call.1
$region0: #{tpu_custom_call.1}
  #allocation0 [shape = 'u32[]', space=smem, size = 0x4, offset = 0x4, fixed_abs, tag = 'smem constant byte address 0x4 - core index']
  #allocation1 [shape = 'u32[72,128]{1,0:T(1,128)}', space=vmem, size = 0x9000, scoped, tag = 'internal scratch']
  %s0 = inlined_call_operand.hbm [shape: f32[2,8,32], index: 0, kind: input, shape index: {}]
  %s1 = inlined_call_operand.hbm [shape: f32[2,8,32], index: 1, kind: input, shape index: {}]
  %s2 = inlined_call_operand.hbm [shape: f32[2,32], index: 2, kind: input, shape index: {}]
  %s3 = inlined_call_operand.hbm [shape: f32[32,32], index: 3, kind: input, shape index: {}]
  %s4 = inlined_call_operand.vmem [shape: f32[1,32], index: 4, kind: input, shape index: {}]
  %s5 = inlined_call_operand.hbm [shape: f32[32,32], index: 5, kind: input, shape index: {}]
  %s6 = inlined_call_operand.vmem [shape: f32[1,32], index: 6, kind: input, shape index: {}]
  %s7 = inlined_call_operand.hbm [shape: f32[32,128], index: 7, kind: input, shape index: {}]
  %s8 = inlined_call_operand.vmem [shape: f32[1,128], index: 8, kind: input, shape index: {}]
  %s9 = inlined_call_operand.hbm [shape: f32[2,8,128], index: 9, kind: output, shape index: {}]
  %s10 = sld [smem:[#allocation0]]
  $region70: #{tpu_custom_call.1} parent=0
    _
  %s12 = ssub.s32 1, %s10
  %s13 = scalar_select 0, %s12, %s10
  $region1: #{tpu_custom_call.1} parent=0
    #allocation2 [shape = 'u8[8192]{0}', space=vmem, size = 0x2000, scoped, tag = 'input window, operand 0, single buffered']
    #allocation3 [shape = 's32[1]{0}', space=sflag, size = 0x4, scoped, tag = 'scoped memory for tpu_custom_call.1']
    #allocation4 [shape = 's32[1]{0}', space=sflag, size = 0x4, scoped, tag = 'scoped memory for tpu_custom_call.1']
    #allocation5 [shape = 'u8[8192]{0}', space=vmem, size = 0x2000, scoped, tag = 'input window, operand 1, single buffered']
    #allocation6 [shape = 's32[1]{0}', space=sflag, size = 0x4, scoped, tag = 'scoped memory for tpu_custom_call.1']
    #allocation7 [shape = 'u8[1024]{0}', space=vmem, size = 0x400, scoped, tag = 'input window, operand 2, single buffered']
    #allocation8 [shape = 'u8[16384]{0}', space=vmem, size = 0x4000, scoped, tag = 'input window, operand 3, single buffered']
    #allocation9 [shape = 's32[1]{0}', space=sflag, size = 0x4, scoped, tag = 'scoped memory for tpu_custom_call.1']
    #allocation10 [shape = 'u8[16384]{0}', space=vmem, size = 0x4000, scoped, tag = 'input window, operand 5, single buffered']
    #allocation11 [shape = 'u8[16384]{0}', space=vmem, size = 0x4000, scoped, tag = 'input window, operand 7, single buffered']
    #allocation12 [shape = 's32[1]{0}', space=sflag, size = 0x4, scoped, tag = 'scoped memory for tpu_custom_call.1']
    #allocation13 [shape = 'u8[8192]{0}', space=vmem, size = 0x2000, scoped, tag = 'output window, operand 0, single buffered']
    %14 = vsyncpa [#allocation3], 0
    %15 = vsyncpa [#allocation6], 0
    %16 = vsyncpa [#allocation9], 0
    %17 = vsyncpa [#allocation12], 0
    %18 = vsyncpa [#allocation4], 0
    // Predicated region
    $region2: #{tpu_custom_call.1} parent=1 // pred_check
      _
    $region3: #{tpu_custom_call.1} parent=1 // pred_check_branch
      %20 = sbr.rel (0) target = $region5
    $region4: #{tpu_custom_call.1} parent=1 // pred_region
      %22 = vsyncadd [#allocation3], 0
      %s23 = sshll.u32 %s0, 4
      %s24 = int_to_ptr.hbm [resolvable:$true] %s23
      %s25 = sshll.u32 [#allocation2], 4
      %s26 = int_to_ptr.vmem [resolvable:$true] %s25
      %31 = dma.hbm_to_vmem [thread:$0]  %s24, 256, %s26, [#allocation3], 128, 128, 8
    $region5: #{tpu_custom_call.1} parent=1 // pred_fallthru
      _
    // Predicated region
    $region6: #{tpu_custom_call.1} parent=1 // pred_check
      _
    $region7: #{tpu_custom_call.1} parent=1 // pred_check_branch
      %33 = sbr.rel (0) target = $region9
    $region8: #{tpu_custom_call.1} parent=1 // pred_region
      %35 = vsyncadd [#allocation6], 0
      %s36 = sshll.u32 %s1, 4
      %s37 = int_to_ptr.hbm [resolvable:$true] %s36
      %s38 = sshll.u32 [#allocation5], 4
      %s39 = int_to_ptr.vmem [resolvable:$true] %s38
      %44 = dma.hbm_to_vmem [thread:$0]  %s37, 256, %s39, [#allocation6], 128, 128, 8
    $region9: #{tpu_custom_call.1} parent=1 // pred_fallthru
      _
    // Predicated region
    $region10: #{tpu_custom_call.1} parent=1 // pred_check
      _
    $region11: #{tpu_custom_call.1} parent=1 // pred_check_branch
      %46 = sbr.rel (0) target = $region13
    $region12: #{tpu_custom_call.1} parent=1 // pred_region
      %48 = vsyncadd [#allocation6], 0
      %s50 = sshll.u32 %s2, 4
      %s51 = int_to_ptr.hbm [resolvable:$true] %s50
      %s52 = sshll.u32 [#allocation7], 4
      %s53 = int_to_ptr.vmem [resolvable:$true] %s52
      %55 = dma.hbm_to_vmem [thread:$0]  %s51, 32, %s53, [#allocation6]
    $region13: #{tpu_custom_call.1} parent=1 // pred_fallthru
      _
    // Predicated region
    $region14: #{tpu_custom_call.1} parent=1 // pred_check
      _
    $region15: #{tpu_custom_call.1} parent=1 // pred_check_branch
      %57 = sbr.rel (0) target = $region17
    $region16: #{tpu_custom_call.1} parent=1 // pred_region
      %59 = vsyncadd [#allocation9], 0
      %s60 = sshll.u32 %s3, 4
      %s61 = int_to_ptr.hbm [resolvable:$true] %s60
      %s62 = sshll.u32 [#allocation8], 4
      %s63 = int_to_ptr.vmem [resolvable:$true] %s62
      %68 = dma.hbm_to_vmem [thread:$0]  %s61, 512, %s63, [#allocation9], 128, 128, 8
    $region17: #{tpu_custom_call.1} parent=1 // pred_fallthru
      _
    // Predicated region
    $region18: #{tpu_custom_call.1} parent=1 // pred_check
      _
    $region19: #{tpu_custom_call.1} parent=1 // pred_check_branch
      %70 = sbr.rel (0) target = $region21
    $region20: #{tpu_custom_call.1} parent=1 // pred_region
      _
    $region21: #{tpu_custom_call.1} parent=1 // pred_fallthru
      _
    // Predicated region
    $region22: #{tpu_custom_call.1} parent=1 // pred_check
      _
    $region23: #{tpu_custom_call.1} parent=1 // pred_check_branch
      %72 = sbr.rel (0) target = $region25
    $region24: #{tpu_custom_call.1} parent=1 // pred_region
      %74 = vsyncadd [#allocation9], 0
      %s75 = sshll.u32 %s5, 4
      %s76 = int_to_ptr.hbm [resolvable:$true] %s75
      %s77 = sshll.u32 [#allocation10], 4
      %s78 = int_to_ptr.vmem [resolvable:$true] %s77
      %83 = dma.hbm_to_vmem [thread:$0]  %s76, 512, %s78, [#allocation9], 128, 128, 8
    $region25: #{tpu_custom_call.1} parent=1 // pred_fallthru
      _
    // Predicated region
    $region26: #{tpu_custom_call.1} parent=1 // pred_check
      _
    $region27: #{tpu_custom_call.1} parent=1 // pred_check_branch
      %85 = sbr.rel (0) target = $region29
    $region28: #{tpu_custom_call.1} parent=1 // pred_region
      _
    $region29: #{tpu_custom_call.1} parent=1 // pred_fallthru
      _
    // Predicated region
    $region30: #{tpu_custom_call.1} parent=1 // pred_check
      _
    $region31: #{tpu_custom_call.1} parent=1 // pred_check_branch
      %87 = sbr.rel (0) target = $region33
    $region32: #{tpu_custom_call.1} parent=1 // pred_region
      %89 = vsyncadd [#allocation12], 0
      %s90 = sshll.u32 %s7, 4
      %s91 = int_to_ptr.hbm [resolvable:$true] %s90
      %s92 = sshll.u32 [#allocation11], 4
      %s93 = int_to_ptr.vmem [resolvable:$true] %s92
      %98 = dma.hbm_to_vmem [thread:$0]  %s91, 512, %s93, [#allocation12], 128, 128, 8
    $region33: #{tpu_custom_call.1} parent=1 // pred_fallthru
      _
    // Predicated region
    $region34: #{tpu_custom_call.1} parent=1 // pred_check
      _
    $region35: #{tpu_custom_call.1} parent=1 // pred_check_branch
      %100 = sbr.rel (0) target = $region37
    $region36: #{tpu_custom_call.1} parent=1 // pred_region
      _
    $region37: #{tpu_custom_call.1} parent=1 // pred_fallthru
      _
    // Predicated region
    $region38: #{tpu_custom_call.1} parent=1 // pred_check
      _
    $region39: #{tpu_custom_call.1} parent=1 // pred_check_branch
      %102 = sbr.rel (0) target = $region41
    $region40: #{tpu_custom_call.1} parent=1 // pred_region
      %104 = dma.done [#allocation3], 256
    $region41: #{tpu_custom_call.1} parent=1 // pred_fallthru
      _
    // Predicated region
    $region42: #{tpu_custom_call.1} parent=1 // pred_check
      _
    $region43: #{tpu_custom_call.1} parent=1 // pred_check_branch
      %106 = sbr.rel (0) target = $region45
    $region44: #{tpu_custom_call.1} parent=1 // pred_region
      %108 = dma.done [#allocation6], 256
    $region45: #{tpu_custom_call.1} parent=1 // pred_fallthru
      _
    // Predicated region
    $region46: #{tpu_custom_call.1} parent=1 // pred_check
      _
    $region47: #{tpu_custom_call.1} parent=1 // pred_check_branch
      %110 = sbr.rel (0) target = $region49
    $region48: #{tpu_custom_call.1} parent=1 // pred_region
      %112 = dma.done [#allocation6], 32
    $region49: #{tpu_custom_call.1} parent=1 // pred_fallthru
      _
    // Predicated region
    $region50: #{tpu_custom_call.1} parent=1 // pred_check
      _
    $region51: #{tpu_custom_call.1} parent=1 // pred_check_branch
      %114 = sbr.rel (0) target = $region53
    $region52: #{tpu_custom_call.1} parent=1 // pred_region
      %116 = dma.done [#allocation9], 512
    $region53: #{tpu_custom_call.1} parent=1 // pred_fallthru
      _
    // Predicated region
    $region54: #{tpu_custom_call.1} parent=1 // pred_check
      _
    $region55: #{tpu_custom_call.1} parent=1 // pred_check_branch
      %118 = sbr.rel (0) target = $region57
    $region56: #{tpu_custom_call.1} parent=1 // pred_region
      %120 = dma.done [#allocation9], 512
    $region57: #{tpu_custom_call.1} parent=1 // pred_fallthru
      _
    // Predicated region
    $region58: #{tpu_custom_call.1} parent=1 // pred_check
      _
    $region59: #{tpu_custom_call.1} parent=1 // pred_check_branch
      %122 = sbr.rel (0) target = $region61
    $region60: #{tpu_custom_call.1} parent=1 // pred_region
      %124 = dma.done [#allocation12], 512
    $region61: #{tpu_custom_call.1} parent=1 // pred_fallthru
      _
    %v125 = vld [vmem:[#allocation5] sm:$0xff]
    %v126 = vld [vmem:[#allocation5 + $0x8] sm:$0xff]
    %v127 = vld [vmem:[#allocation7] sm:$0x3]
    %v128 = vld [vmem:[#allocation10] sm:$0xff]
    %v129 = vld [vmem:[#allocation10 + $0x8] sm:$0xff]
    %v130 = vld [vmem:[#allocation10 + $0x10] sm:$0xff]
    %v131 = vld [vmem:[#allocation10 + $0x18] sm:$0xff]
    %v132 = vld [vmem:[%s6] sm:$0x1]
    %v134 = vperm.slane %v132, 0
    %vm136 = vcmask 261120
    %v138 = vsel %vm136, %v127, 0
    %140 = vmatpush.msra.mxu0 0.0
    %141 = vmatpush.msra.mxu0 0.0
    %142 = vmatpush.msra.mxu0 0.0
    %143 = vmatpush.msra.mxu0 0.0
    %144 = vmatpush.msra.mxu0 0.0
    %145 = vmatpush.msra.mxu0 0.0
    %146 = vmatpush.msra.mxu0 0.0
    %147 = vmatpush.msra.mxu0 0.0
    %148 = vmatpush.msra.mxu0 0.0
    %149 = vmatpush.msra.mxu0 0.0
    %150 = vmatpush.msra.mxu0 0.0
    %151 = vmatpush.msra.mxu0 0.0
    %152 = vmatpush.msra.mxu0 %v131
    %153 = vmatpush.msra.mxu0 %v130
    %154 = vmatpush.msra.mxu0 %v129
    %155 = vmatpush.msra.mxu0 %v128
    %156 = vmatmul.f32.gmra.mxu0 %v138
    %v157 = vpop.f32.mrf.mxu0
    %v158 = vadd.f32 %v134, %v157
    %159 = vdwg.mxu0
    %v161 = vrot.slane %v158, 1
    %v162 = vperm.slane %v158, 0
    %v163 = vperm.slane %v161, 0
    %v166 = vadd.f32 %v125, %v162
    %v167 = vadd.f32 %v126, %v163
    %v168 = vtanh.pop %v166
    %v169 = vtanh.pop %v167
    %v170 = vld [vmem:[#allocation8] sm:$0xff]
    %v171 = vld [vmem:[#allocation8 + $0x8] sm:$0xff]
    %v172 = vld [vmem:[#allocation8 + $0x10] sm:$0xff]
    %v173 = vld [vmem:[#allocation8 + $0x18] sm:$0xff]
    %v174 = vld [vmem:[%s4] sm:$0x1]
    %v176 = vperm.slane %v174, 0
    %v179 = vsel %vm136, %v168, 0
    %v182 = vsel %vm136, %v169, 0
    %184 = vmatpush.msra.mxu0 0.0
    %185 = vmatpush.msra.mxu0 0.0
    %186 = vmatpush.msra.mxu0 0.0
    %187 = vmatpush.msra.mxu0 0.0
    %188 = vmatpush.msra.mxu0 0.0
    %189 = vmatpush.msra.mxu0 0.0
    %190 = vmatpush.msra.mxu0 0.0
    %191 = vmatpush.msra.mxu0 0.0
    %192 = vmatpush.msra.mxu0 0.0
    %193 = vmatpush.msra.mxu0 0.0
    %194 = vmatpush.msra.mxu0 0.0
    %195 = vmatpush.msra.mxu0 0.0
    %196 = vmatpush.msra.mxu0 %v173
    %197 = vmatpush.msra.mxu0 %v172
    %198 = vmatpush.msra.mxu0 %v171
    %199 = vmatpush.msra.mxu0 %v170
    %200 = vmatmul.f32.gmra.mxu0 %v179
    %v201 = vpop.f32.mrf.mxu0
    %v202 = vadd.f32 %v176, %v201
    %203 = vmatmul.f32.gmra.mxu0 %v182
    %v204 = vpop.f32.mrf.mxu0
    %v205 = vadd.f32 %v176, %v204
    %206 = vdwg.mxu0
    %v207 = vld [vmem:[#allocation2] sm:$0xff]
    %v208 = vld [vmem:[#allocation2 + $0x8] sm:$0xff]
    %v209 = vmul.f32 %v125, %v202
    %v210 = vmul.f32 %v126, %v205
    %v211 = vadd.f32 %v207, %v209
    %v212 = vadd.f32 %v208, %v210
    %v213 = vld [vmem:[#allocation11] sm:$0xff]
    %v214 = vld [vmem:[#allocation11 + $0x8] sm:$0xff]
    %v215 = vld [vmem:[#allocation11 + $0x10] sm:$0xff]
    %v216 = vld [vmem:[#allocation11 + $0x18] sm:$0xff]
    %v217 = vld [vmem:[%s8] sm:$0x1]
    %v219 = vperm.slane %v217, 0
    %v222 = vsel %vm136, %v211, 0
    %v225 = vsel %vm136, %v212, 0
    %227 = vmatpush.msra.mxu0 0.0
    %228 = vmatpush.msra.mxu0 0.0
    %229 = vmatpush.msra.mxu0 0.0
    %230 = vmatpush.msra.mxu0 0.0
    %231 = vmatpush.msra.mxu0 0.0
    %232 = vmatpush.msra.mxu0 0.0
    %233 = vmatpush.msra.mxu0 0.0
    %234 = vmatpush.msra.mxu0 0.0
    %235 = vmatpush.msra.mxu0 0.0
    %236 = vmatpush.msra.mxu0 0.0
    %237 = vmatpush.msra.mxu0 0.0
    %238 = vmatpush.msra.mxu0 0.0
    %239 = vmatpush.msra.mxu0 %v216
    %240 = vmatpush.msra.mxu0 %v215
    %241 = vmatpush.msra.mxu0 %v214
    %242 = vmatpush.msra.mxu0 %v213
    %243 = vmatmul.f32.gmra.mxu0 %v222
    %v244 = vpop.f32.mrf.mxu0
    %v245 = vadd.f32 %v219, %v244
    %246 = vmatmul.f32.gmra.mxu0 %v225
    %v247 = vpop.f32.mrf.mxu0
    %v248 = vadd.f32 %v219, %v247
    %249 = vdwg.mxu0
    %250 = vst [vmem:[#allocation13] sm:$0xff] %v245
    %251 = vst [vmem:[#allocation13 + $0x8] sm:$0xff] %v248
    // Predicated region
    $region62: #{tpu_custom_call.1} parent=1 // pred_check
      _
    $region63: #{tpu_custom_call.1} parent=1 // pred_check_branch
      %253 = sbr.rel (0) target = $region65
    $region64: #{tpu_custom_call.1} parent=1 // pred_region
      %255 = vsyncadd [#allocation4], 0
      %s256 = sshll.u32 [#allocation13], 4
      %s257 = int_to_ptr.vmem [resolvable:$true] %s256
      %s258 = sshll.u32 %s9, 4
      %s259 = int_to_ptr.hbm [resolvable:$true] %s258
      %264 = dma.vmem_to_hbm [thread:$0]  %s257, 256, %s259, [#allocation4], 128, 128, 8
    $region65: #{tpu_custom_call.1} parent=1 // pred_fallthru
      _
    // Predicated region
    $region66: #{tpu_custom_call.1} parent=1 // pred_check
      _
    $region67: #{tpu_custom_call.1} parent=1 // pred_check_branch
      %266 = sbr.rel (0) target = $region69
    $region68: #{tpu_custom_call.1} parent=1 // pred_region
      %268 = dma.done [#allocation4], 256
    $region69: #{tpu_custom_call.1} parent=1 // pred_fallthru
      _
    %269 = vsyncpa [#allocation3], 1
    %270 = vsyncpa [#allocation6], 1
    %271 = vsyncpa [#allocation9], 1
    %272 = vsyncpa [#allocation12], 1
    %273 = vsyncpa [#allocation4], 1

</llo_original>
